<compile_context>
chip_gen: v7x
topology: tpu7x:2x2x1
jax: 0.10.0
libtpu: 0.0.40
codegen_flags: <defaults>
</compile_context>

<pallas_src>
import jax
import jax.numpy as jnp
from jax import lax
from jax.experimental import pallas as pl
from jax.experimental.pallas import tpu as pltpu


def _round_up(x, n):
    return ((x + n - 1) // n) * n


def _weighted_gram_kernel(w_ref, x_ref, pi_ref, out_ref):
    """One grid step: G_c (+)= (W_tile * pi_c) @ X_tile for a chunk of `cc`
    membership rows, using a single stacked MXU matmul.

    w_ref  : (p_pad, tm)             W = X.T tile (builds the weighted LHS)
    x_ref  : (tm, p_pad)             X tile (RHS in native (K, N) layout)
    pi_ref : (cc, tm)                membership rows for this class chunk
    out_ref: (cc, p_pad, p_pad) f32  accumulator, revisited across the m axis
    """
    j = pl.program_id(1)

    w = w_ref[...]                                   # (p_pad, tm)
    pi = pi_ref[...]                                 # (cc, tm)
    cc = pi.shape[0]
    p_pad, tm = w.shape

    # Stacked per-class weighting -> one (cc*p_pad, tm) LHS instead of cc
    # short (p_pad, tm) matmuls.  The reshape only collapses leading dims
    # (p_pad is sublane-aligned), so it is layout-trivial.
    wp = (pi[:, None, :] * w[None, :, :]).reshape(cc * p_pad, tm)

    # NN contraction (LHS last dim vs RHS first dim): both operands stay in
    # their native layouts, result accumulates in f32 on the MXU.
    g = lax.dot_general(
        wp, x_ref[...],
        dimension_numbers=(((1,), (0,)), ((), ())),
        preferred_element_type=jnp.float32,
    ).reshape(cc, p_pad, p_pad)

    # First m-tile: store directly (saves a zero-init pass and one full
    # read-modify-write of the accumulator slab — matters on v5e's single
    # vector-store slot).  Later m-tiles: accumulate.
    @pl.when(j == 0)
    def _store():
        out_ref[...] = g

    @pl.when(j != 0)
    def _accum():
        out_ref[...] += g


def _block_vmem_bytes(cc, p_pad, tm, itemsize):
    """Per-grid-step VMEM footprint: double-buffered in/out blocks plus the
    materialised weighted temporary and the matmul result."""
    acc = 2 * cc * p_pad * p_pad * 4                              # out block
    ins = 2 * (p_pad * tm + tm * p_pad + cc * tm) * itemsize      # W, X, Pi
    tmp = cc * p_pad * tm * itemsize + cc * p_pad * p_pad * 4     # wp + g
    return acc + ins + tmp


def weighted_grams(X, Pi_rows, *, compute_dtype=jnp.float32, block_m=1024):
    """X: (m, p); Pi_rows: (n_rows, m).  Returns (n_rows, p, p) f32 Grams
    G_i = X.T @ diag(Pi_rows[i]) @ X computed with a Pallas TPU kernel."""
    m, p = X.shape
    n_rows = Pi_rows.shape[0]
    itemsize = jnp.dtype(compute_dtype).itemsize

    # ---- Geometry ------------------------------------------------------
    p_pad = _round_up(p, 128)              # lane-dense output, MXU-friendly N
    m128 = _round_up(m, 128)

    # VMEM budget: query the chip (v7x has 64 MiB physical vs 128 MiB on
    # v5e/v6e); fall back to the conservative 64 MiB if the query fails.
    try:
        vmem_cap = int(pltpu.get_tpu_info().vmem_capacity_bytes)
    except Exception:
        vmem_cap = 64 << 20
    budget = int(vmem_cap * 0.7)

    # m-tile: as large as block_m allows, picked so the last tile carries as
    # little zero padding as possible (ties broken towards the largest tm =
    # fewest grid steps and fewest accumulator revisits).
    tm_cap = min(m128, max(128, _round_up(block_m, 128)))
    tm = min(range(128, tm_cap + 1, 128),
             key=lambda t: (_round_up(m128, t) - m128, -t))
    m_pad = _round_up(m128, tm)
    n_m_tiles = m_pad // tm

    # Class-chunk size cc:
    #  * full extent (cc == n_rows): no 8-alignment rule, no padded all-zero
    #    Gram rows — preferred whenever the VMEM budget allows;
    #  * split into two equal chunks when that is free, so both v7x
    #    TensorCores get a "parallel" grid slice;
    #  * otherwise cc is a multiple of 8 (Pi-block sublane rule) chosen within
    #    budget to minimise padded class rows.
    if _block_vmem_bytes(n_rows, p_pad, tm, itemsize) <= budget:
        if (n_rows >= 16 and n_rows % 16 == 0
                and _block_vmem_bytes(n_rows // 2, p_pad, tm, itemsize) <= budget):
            cc = n_rows // 2
        else:
            cc = n_rows
    else:
        cands = [c for c in range(8, _round_up(max(n_rows, 8), 8) + 1, 8)
                 if _block_vmem_bytes(c, p_pad, tm, itemsize) <= budget]
        if not cands:
            # TODO(synk): very large feature dims would need a third grid axis
            # tiling the Gram row dimension; fall back to the smallest chunk.
            cands = [8 if n_rows >= 8 else n_rows]
        cc = min(cands, key=lambda c: (_round_up(n_rows, c) - n_rows, -c))
    n_rows_pad = _round_up(n_rows, cc)
    kc = n_rows_pad // cc

    # ---- Padded operands (zero padding keeps the Grams exact) ----------
    Xc = X.astype(compute_dtype)
    Xp = jnp.pad(Xc, ((0, m_pad - m), (0, p_pad - p)))           # (m_pad, p_pad)
    Wp = jnp.pad(Xc.T, ((0, p_pad - p), (0, m_pad - m)))         # (p_pad, m_pad)
    Pip = jnp.pad(Pi_rows.astype(compute_dtype),
                  ((0, n_rows_pad - n_rows), (0, m_pad - m)))    # (rows, m_pad)

    block_bytes = _block_vmem_bytes(cc, p_pad, tm, itemsize)
    vmem_limit = int(min(vmem_cap, max(32 << 20, block_bytes + (8 << 20))))

    cost = pl.CostEstimate(
        flops=2 * kc * cc * p_pad * p_pad * m_pad,
        transcendentals=0,
        bytes_accessed=int(kc * 2 * p_pad * m_pad * itemsize     # W + X per chunk
                           + n_rows_pad * m_pad * itemsize       # Pi
                           + n_rows_pad * p_pad * p_pad * 4),    # Grams out
    )

    grams = pl.pallas_call(
        _weighted_gram_kernel,
        out_shape=jax.ShapeDtypeStruct((n_rows_pad, p_pad, p_pad), jnp.float32),
        grid_spec=pltpu.PrefetchScalarGridSpec(
            num_scalar_prefetch=0,
            grid=(kc, n_m_tiles),                      # m (reduction) axis last
            in_specs=[
                pl.BlockSpec((p_pad, tm), lambda c, j: (0, j)),    # W m-tile
                pl.BlockSpec((tm, p_pad), lambda c, j: (j, 0)),    # X m-tile
                pl.BlockSpec((cc, tm), lambda c, j: (c, j)),       # Pi chunk
            ],
            out_specs=pl.BlockSpec((cc, p_pad, p_pad),
                                   lambda c, j: (c, 0, 0)),
        ),
        compiler_params=pltpu.CompilerParams(
            dimension_semantics=("parallel", "arbitrary"),
            vmem_limit_bytes=vmem_limit),
        cost_estimate=cost,
    )(Wp, Xp, Pip)

    return grams[:n_rows, :p, :p]


def mcr2_forward(X, Y, num_classes=None, eps=0.01, gamma=1.0,
                 compute_dtype=jnp.float32, block_m=1024):
    """Mirrors MaximalCodingRateReduction.forward.

    X: (m, p) float features.  Y: (m,) int labels or (m, k) soft assignments.
    Returns (total_loss, (discrimn_loss, compress_loss)).
    Note: num_classes must be given explicitly when tracing under jax.jit.
    """
    X = X.astype(jnp.float32)

    if Y.ndim == 1:
        if num_classes is None:
            num_classes = int(Y.max()) + 1    # needs concrete Y (not jit-safe)
        Pi = jax.nn.one_hot(Y, num_classes, dtype=jnp.float32).T    # (k, m)
    else:
        if num_classes is None:
            num_classes = Y.shape[1]
        Pi = Y.T.astype(jnp.float32)                                # (k, m)

    m, p = X.shape
    k = num_classes

    # Row 0 = all-ones -> plain Gram W @ W.T (discriminative term); rows 1..k
    # are per-class weights (kept explicit so soft labels that do not sum to 1
    # stay exact).
    Pi_aug = jnp.concatenate([jnp.ones((1, m), jnp.float32), Pi], axis=0)

    grams = weighted_grams(X, Pi_aug, compute_dtype=compute_dtype,
                           block_m=block_m)            # (k+1, p, p) f32

    I = jnp.eye(p, dtype=jnp.float32)

    # TODO(synk): logdet (LU factorization) has no clean Pallas TPU
    # equivalent; it is computed with jnp.linalg.slogdet on the (p, p) Grams.

    # Discriminative term: logdet(I + (p / (m * eps)) * W @ W.T) / 2
    scalar = p / (m * eps)
    discrimn_loss = 0.5 * jnp.linalg.slogdet(I + scalar * grams[0])[1]

    # Compressive term.
    trPi = Pi.sum(axis=1) + 1e-8                       # (k,)
    scale = (p / (trPi * eps)).reshape(k, 1, 1)
    mats = I[None, :, :] + scale * grams[1:]           # (k, p, p)
    log_det = jnp.linalg.slogdet(mats)[1]              # (k,)
    compress_loss = jnp.sum(trPi * log_det / (2.0 * m))

    total_loss = -discrimn_loss + gamma * compress_loss
    return total_loss, (discrimn_loss, compress_loss)


if __name__ == "__main__":
    key = jax.random.PRNGKey(0)
    kx, ky, ks = jax.random.split(key, 3)

    # Small shapes consistent with the forward: m=8 samples, p=32 features,
    # k=4 classes.  X: (m, p), Y: (m,) integer labels.
    m, p, k = 8, 32, 4
    X = jax.random.normal(kx, (m, p), dtype=jnp.float32)
    X = X / jnp.linalg.norm(X, axis=1, keepdims=True)   # unit-norm features
    Y = jax.random.randint(ky, (m,), 0, k)

    total, (discrimn, compress) = mcr2_forward(X, Y, num_classes=k,
                                               eps=0.01, gamma=1.0)
    jax.block_until_ready(total)

    # Lightweight correctness check against a pure-JAX reference (f32).
    Pi_ref = jax.nn.one_hot(Y, k, dtype=jnp.float32).T              # (k, m)
    W_ref = X.T
    I = jnp.eye(p, dtype=jnp.float32)
    d_ref = 0.5 * jnp.linalg.slogdet(I + (p / (m * 0.01)) * W_ref @ W_ref.T)[1]
    trPi_ref = Pi_ref.sum(1) + 1e-8
    mats_ref = I[None] + (p / (trPi_ref * 0.01)).reshape(k, 1, 1) * jnp.einsum(
        'pm,km,qm->kpq', W_ref, Pi_ref, W_ref)
    c_ref = jnp.sum(trPi_ref * jnp.linalg.slogdet(mats_ref)[1] / (2.0 * m))
    t_ref = -d_ref + c_ref
    assert jnp.allclose(discrimn, d_ref, rtol=1e-3, atol=1e-3), (discrimn, d_ref)
    assert jnp.allclose(compress, c_ref, rtol=1e-3, atol=1e-3), (compress, c_ref)
    assert jnp.allclose(total, t_ref, rtol=1e-3, atol=1e-3), (total, t_ref)

    # Soft-assignment branch (Y of shape (m, k)).
    Ysoft = jax.nn.softmax(jax.random.normal(ks, (m, k), jnp.float32), axis=-1)
    total2, _ = mcr2_forward(X, Ysoft, eps=0.01, gamma=1.0)
    jax.block_until_ready(total2)

    print("KERNEL_OK")
</pallas_src>

<mosaic_0001>
module attributes {stable_mosaic.version = 11 : i64} {
  func.func @_weighted_gram_kernel(%arg0: i32, %arg1: i32, %arg2: memref<128x128xf32, #tpu.memory_space<vmem>>, %arg3: memref<128x128xf32, #tpu.memory_space<vmem>>, %arg4: memref<5x128xf32, #tpu.memory_space<vmem>>, %arg5: memref<5x128x128xf32, #tpu.memory_space<vmem>>) attributes {dimension_semantics = [#tpu.dimension_semantics<parallel>, #tpu.dimension_semantics<arbitrary>], iteration_bounds = array<i64: 1, 1>, scalar_prefetch = 0 : i64, scratch_operands = 0 : i64, tpu.core_type = #tpu.core_type<tc>, window_params = [{transform_indices = @transform_0, window_bounds = array<i64: 128, 128>}, {transform_indices = @transform_1, window_bounds = array<i64: 128, 128>}, {transform_indices = @transform_2, window_bounds = array<i64: 5, 128>}, {transform_indices = @transform_3, window_bounds = array<i64: 5, 128, 128>}]} {
    %c0 = arith.constant 0 : index
    %c0_0 = arith.constant 0 : index
    %0 = vector.load %arg2[%c0, %c0_0] : memref<128x128xf32, #tpu.memory_space<vmem>>, vector<128x128xf32>
    %c0_1 = arith.constant 0 : index
    %c0_2 = arith.constant 0 : index
    %1 = vector.load %arg4[%c0_1, %c0_2] : memref<5x128xf32, #tpu.memory_space<vmem>>, vector<5x128xf32>
    %2 = vector.shape_cast %1 : vector<5x128xf32> to vector<5x1x128xf32>
    %3 = vector.shape_cast %0 : vector<128x128xf32> to vector<1x128x128xf32>
    %4 = vector.broadcast %2 : vector<5x1x128xf32> to vector<5x128x128xf32>
    %5 = vector.broadcast %3 : vector<1x128x128xf32> to vector<5x128x128xf32>
    %6 = arith.mulf %4, %5 : vector<5x128x128xf32>
    %7 = vector.shape_cast %6 : vector<5x128x128xf32> to vector<640x128xf32>
    %c0_3 = arith.constant 0 : index
    %c0_4 = arith.constant 0 : index
    %8 = vector.load %arg3[%c0_3, %c0_4] : memref<128x128xf32, #tpu.memory_space<vmem>>, vector<128x128xf32>
    %cst = arith.constant dense<0.000000e+00> : vector<640x128xf32>
    %9 = tpu.matmul %7, %8, %cst {dimension_numbers = #tpu.dot_dimension_numbers<[1], [0], [0], [1], [0, 0, 1, 1], [], []>} : vector<640x128xf32>, vector<128x128xf32>, vector<640x128xf32> -> vector<640x128xf32>
    %10 = vector.shape_cast %9 : vector<640x128xf32> to vector<5x128x128xf32>
    %c0_i32 = arith.constant 0 : i32
    %11 = arith.cmpi eq, %arg1, %c0_i32 : i32
    %12 = arith.extui %11 : i1 to i32
    %c0_i32_5 = arith.constant 0 : i32
    %13 = arith.cmpi ne, %12, %c0_i32_5 : i32
    scf.if %13 {
      %c0_8 = arith.constant 0 : index
      %c0_9 = arith.constant 0 : index
      %c0_10 = arith.constant 0 : index
      %17 = vector.load %arg5[%c0_8, %c0_9, %c0_10] : memref<5x128x128xf32, #tpu.memory_space<vmem>>, vector<5x128x128xf32>
      tpu.vector_store %arg5[%c0_8, %c0_9, %c0_10], %10 {strides = array<i32>} : memref<5x128x128xf32, #tpu.memory_space<vmem>>, vector<5x128x128xf32>,
    } else {
    }
    %c0_i32_6 = arith.constant 0 : i32
    %14 = arith.cmpi ne, %arg1, %c0_i32_6 : i32
    %15 = arith.extui %14 : i1 to i32
    %c0_i32_7 = arith.constant 0 : i32
    %16 = arith.cmpi ne, %15, %c0_i32_7 : i32
    scf.if %16 {
      %c0_8 = arith.constant 0 : index
      %c0_9 = arith.constant 0 : index
      %c0_10 = arith.constant 0 : index
      %17 = vector.load %arg5[%c0_8, %c0_9, %c0_10] : memref<5x128x128xf32, #tpu.memory_space<vmem>>, vector<5x128x128xf32>
      %18 = arith.addf %17, %10 : vector<5x128x128xf32>
      %c0_11 = arith.constant 0 : index
      %c0_12 = arith.constant 0 : index
      %c0_13 = arith.constant 0 : index
      %19 = vector.load %arg5[%c0_11, %c0_12, %c0_13] : memref<5x128x128xf32, #tpu.memory_space<vmem>>, vector<5x128x128xf32>
      tpu.vector_store %arg5[%c0_11, %c0_12, %c0_13], %18 {strides = array<i32>} : memref<5x128x128xf32, #tpu.memory_space<vmem>>, vector<5x128x128xf32>,
    } else {
    }
    return
  }
  func.func @transform_0(%arg0: i32, %arg1: i32) -> (i32, i32) {
    %c0_i32 = arith.constant 0 : i32
    %c0_i32_0 = arith.constant 0 : i32
    return %c0_i32, %arg1 : i32, i32
  }
  func.func @transform_1(%arg0: i32, %arg1: i32) -> (i32, i32) {
    %c0_i32 = arith.constant 0 : i32
    %c0_i32_0 = arith.constant 0 : i32
    return %arg1, %c0_i32 : i32, i32
  }
  func.func @transform_2(%arg0: i32, %arg1: i32) -> (i32, i32) {
    %c0_i32 = arith.constant 0 : i32
    return %arg0, %arg1 : i32, i32
  }
  func.func @transform_3(%arg0: i32, %arg1: i32) -> (i32, i32, i32) {
    %c0_i32 = arith.constant 0 : i32
    %c0_i32_0 = arith.constant 0 : i32
    %c0_i32_1 = arith.constant 0 : i32
    return %arg0, %c0_i32, %c0_i32_0 : i32, i32, i32
  }
}

</mosaic_0001>

<llo_original>
// kernel: tpu_custom_call.1
$region0: #{tpu_custom_call.1}
  #allocation0 [shape = 'u32[]', space=smem, size = 0x4, offset = 0x4, fixed_abs, tag = 'smem constant byte address 0x4 - core index']
  #allocation1 [shape = 'u32[144,128]{1,0:T(1,128)}', space=vmem, size = 0x12000, scoped, tag = 'internal scratch']
  %s0 = inlined_call_operand.hbm [shape: f32[128,128], index: 0, kind: input, shape index: {}]
  %s1 = inlined_call_operand.hbm [shape: f32[128,128], index: 1, kind: input, shape index: {}]
  %s2 = inlined_call_operand.hbm [shape: f32[5,128], index: 2, kind: input, shape index: {}]
  %s3 = inlined_call_operand.hbm [shape: f32[5,128,128], index: 3, kind: output, shape index: {}]
  %s4 = sld [smem:[#allocation0]]
  $region42: #{tpu_custom_call.1} parent=0
    _
  %s6 = ssub.s32 1, %s4
  %s7 = scalar_select 0, %s6, %s4
  $region1: #{tpu_custom_call.1} parent=0
    #allocation2 [shape = 'u8[65536]{0}', space=vmem, size = 0x10000, scoped, tag = 'input window, operand 0, single buffered']
    #allocation3 [shape = 's32[1]{0}', space=sflag, size = 0x4, scoped, tag = 'scoped memory for tpu_custom_call.1']
    #allocation4 [shape = 's32[1]{0}', space=sflag, size = 0x4, scoped, tag = 'scoped memory for tpu_custom_call.1']
    #allocation5 [shape = 'u8[65536]{0}', space=vmem, size = 0x10000, scoped, tag = 'input window, operand 1, single buffered']
    #allocation6 [shape = 's32[1]{0}', space=sflag, size = 0x4, scoped, tag = 'scoped memory for tpu_custom_call.1']
    #allocation7 [shape = 'u8[4096]{0}', space=vmem, size = 0x1000, scoped, tag = 'input window, operand 2, single buffered']
    #allocation8 [shape = 'u8[327680]{0}', space=vmem, size = 0x50000, scoped, tag = 'output window, operand 0, single buffered']
    %8 = vsyncpa [#allocation3], 0
    %9 = vsyncpa [#allocation6], 0
    %10 = vsyncpa [#allocation4], 0
    // Predicated region
    $region2: #{tpu_custom_call.1} parent=1 // pred_check
      _
    $region3: #{tpu_custom_call.1} parent=1 // pred_check_branch
      %12 = sbr.rel (0) target = $region5
    $region4: #{tpu_custom_call.1} parent=1 // pred_region
      %s14 = ssub.s32 2048, 2048
      %15 = vsyncadd [#allocation3], %s14
      %s16 = sshll.u32 [#allocation2], 4
      %s17 = int_to_ptr.vmem [resolvable:$true] %s16
      %22 = dma.hbm_to_vmem [thread:$0]  %s0, 2048, %s17, [#allocation3], 128, 128, 8
    $region5: #{tpu_custom_call.1} parent=1 // pred_fallthru
      _
    // Predicated region
    $region6: #{tpu_custom_call.1} parent=1 // pred_check
      _
    $region7: #{tpu_custom_call.1} parent=1 // pred_check_branch
      %24 = sbr.rel (0) target = $region9
    $region8: #{tpu_custom_call.1} parent=1 // pred_region
      %s26 = ssub.s32 2048, 2048
      %27 = vsyncadd [#allocation6], %s26
      %s28 = sshll.u32 [#allocation5], 4
      %s29 = int_to_ptr.vmem [resolvable:$true] %s28
      %34 = dma.hbm_to_vmem [thread:$0]  %s1, 2048, %s29, [#allocation6], 128, 128, 8
    $region9: #{tpu_custom_call.1} parent=1 // pred_fallthru
      _
    // Predicated region
    $region10: #{tpu_custom_call.1} parent=1 // pred_check
      _
    $region11: #{tpu_custom_call.1} parent=1 // pred_check_branch
      %36 = sbr.rel (0) target = $region13
    $region12: #{tpu_custom_call.1} parent=1 // pred_region
      %s38 = ssub.s32 128, 128
      %39 = vsyncadd [#allocation6], %s38
      %s41 = sshll.u32 [#allocation7], 4
      %s42 = int_to_ptr.vmem [resolvable:$true] %s41
      %44 = dma.hbm_to_vmem [thread:$0]  %s2, 128, %s42, [#allocation6]
    $region13: #{tpu_custom_call.1} parent=1 // pred_fallthru
      _
    // Predicated region
    $region14: #{tpu_custom_call.1} parent=1 // pred_check
      _
    $region15: #{tpu_custom_call.1} parent=1 // pred_check_branch
      %46 = sbr.rel (0) target = $region17
    $region16: #{tpu_custom_call.1} parent=1 // pred_region
      %47 = dma.done [#allocation3], 2048
    $region17: #{tpu_custom_call.1} parent=1 // pred_fallthru
      _
    // Predicated region
    $region18: #{tpu_custom_call.1} parent=1 // pred_check
      _
    $region19: #{tpu_custom_call.1} parent=1 // pred_check_branch
      %49 = sbr.rel (0) target = $region21
    $region20: #{tpu_custom_call.1} parent=1 // pred_region
      %50 = dma.done [#allocation6], 2048
    $region21: #{tpu_custom_call.1} parent=1 // pred_fallthru
      _
    // Predicated region
    $region22: #{tpu_custom_call.1} parent=1 // pred_check
      _
    $region23: #{tpu_custom_call.1} parent=1 // pred_check_branch
      %52 = sbr.rel (0) target = $region25
    $region24: #{tpu_custom_call.1} parent=1 // pred_region
      %53 = dma.done [#allocation6], 128
    $region25: #{tpu_custom_call.1} parent=1 // pred_fallthru
      _
    %v54 = vld [vmem:[#allocation2] sm:$0xff]
    %v55 = vld [vmem:[#allocation2 + $0x8] sm:$0xff]
    %v56 = vld [vmem:[#allocation2 + $0x10] sm:$0xff]
    %v57 = vld [vmem:[#allocation2 + $0x18] sm:$0xff]
    %v58 = vld [vmem:[#allocation2 + $0x20] sm:$0xff]
    %v59 = vld [vmem:[#allocation2 + $0x28] sm:$0xff]
    %v60 = vld [vmem:[#allocation2 + $0x30] sm:$0xff]
    %v61 = vld [vmem:[#allocation2 + $0x38] sm:$0xff]
    %v62 = vld [vmem:[#allocation2 + $0x40] sm:$0xff]
    %v63 = vld [vmem:[#allocation2 + $0x48] sm:$0xff]
    %v64 = vld [vmem:[#allocation2 + $0x50] sm:$0xff]
    %v65 = vld [vmem:[#allocation2 + $0x58] sm:$0xff]
    %v66 = vld [vmem:[#allocation2 + $0x60] sm:$0xff]
    %v67 = vld [vmem:[#allocation2 + $0x68] sm:$0xff]
    %v68 = vld [vmem:[#allocation2 + $0x70] sm:$0xff]
    %v69 = vld [vmem:[#allocation2 + $0x78] sm:$0xff]
    %v70 = vld [vmem:[#allocation7] sm:$0x1f]
    %v72 = vcombine.high %v70, %v70
    %v74 = vunpack.c.l.s4 1966171168
    %v75 = vunpack.c.0.s8 %v74
    %v76 = vlaneseq
    %v77 = vshrl.u32 %v76, 7
    %v78 = vsub.s32 %v75, %v77
    %v79 = vrot.slane %v70, %v78
    %v81 = vunpack.c.l.s4 1966171168
    %v82 = vunpack.c.0.s8 %v81
    %v83 = vlaneseq
    %v84 = vshrl.u32 %v83, 7
    %v85 = vsub.s32 %v82, %v84
    %v86 = vrot.slane %v72, %v85
    %v87 = vcombine.high %v79, %v79
    %v89 = vunpack.c.l.s4 1966171168
    %v90 = vunpack.c.0.s8 %v89
    %v91 = vlaneseq
    %v92 = vshrl.u32 %v91, 7
    %v93 = vsub.s32 %v90, %v92
    %v94 = vrot.slane %v79, %v93
    %v96 = vunpack.c.l.s4 1966171168
    %v97 = vunpack.c.0.s8 %v96
    %v98 = vlaneseq
    %v99 = vshrl.u32 %v98, 7
    %v100 = vsub.s32 %v97, %v99
    %v101 = vrot.slane %v86, %v100
    %v103 = vunpack.c.l.s4 1966171168
    %v104 = vunpack.c.0.s8 %v103
    %v105 = vlaneseq
    %v106 = vshrl.u32 %v105, 7
    %v107 = vsub.s32 %v104, %v106
    %v108 = vrot.slane %v87, %v107
    %v109 = vcombine.high %v94, %v94
    %v110 = vcombine.high %v108, %v108
    %v111 = vlaneseq
    %v112 = vshrl.u32 %v111, 7
    %v113 = vsub.s32 0, %v112
    %v114 = vrot.slane %v94, %v113
    %v115 = vlaneseq
    %v116 = vshrl.u32 %v115, 7
    %v117 = vsub.s32 0, %v116
    %v118 = vrot.slane %v108, %v117
    %v119 = vlaneseq
    %v120 = vshrl.u32 %v119, 7
    %v121 = vsub.s32 0, %v120
    %v122 = vrot.slane %v109, %v121
    %v123 = vlaneseq
    %v124 = vshrl.u32 %v123, 7
    %v125 = vsub.s32 0, %v124
    %v126 = vrot.slane %v110, %v125
    %v127 = vlaneseq
    %v128 = vshrl.u32 %v127, 7
    %v129 = vsub.s32 0, %v128
    %v130 = vrot.slane %v101, %v129
    %v136 = vmul.f32 %v114, %v54
    %v137 = vmul.f32 %v114, %v55
    %v138 = vmul.f32 %v114, %v56
    %v139 = vmul.f32 %v114, %v57
    %v140 = vmul.f32 %v114, %v58
    %v141 = vmul.f32 %v114, %v59
    %v142 = vmul.f32 %v114, %v60
    %v143 = vmul.f32 %v114, %v61
    %v144 = vmul.f32 %v114, %v62
    %v145 = vmul.f32 %v114, %v63
    %v146 = vmul.f32 %v114, %v64
    %v147 = vmul.f32 %v114, %v65
    %v148 = vmul.f32 %v114, %v66
    %v149 = vmul.f32 %v114, %v67
    %v150 = vmul.f32 %v114, %v68
    %v151 = vmul.f32 %v114, %v69
    %v152 = vmul.f32 %v118, %v54
    %v153 = vmul.f32 %v118, %v55
    %v154 = vmul.f32 %v118, %v56
    %v155 = vmul.f32 %v118, %v57
    %v156 = vmul.f32 %v118, %v58
    %v157 = vmul.f32 %v118, %v59
    %v158 = vmul.f32 %v118, %v60
    %v159 = vmul.f32 %v118, %v61
    %v160 = vmul.f32 %v118, %v62
    %v161 = vmul.f32 %v118, %v63
    %v162 = vmul.f32 %v118, %v64
    %v163 = vmul.f32 %v118, %v65
    %v164 = vmul.f32 %v118, %v66
    %v165 = vmul.f32 %v118, %v67
    %v166 = vmul.f32 %v118, %v68
    %v167 = vmul.f32 %v118, %v69
    %v168 = vmul.f32 %v122, %v54
    %v169 = vmul.f32 %v122, %v55
    %v170 = vmul.f32 %v122, %v56
    %v171 = vmul.f32 %v122, %v57
    %v172 = vmul.f32 %v122, %v58
    %v173 = vmul.f32 %v122, %v59
    %v174 = vmul.f32 %v122, %v60
    %v175 = vmul.f32 %v122, %v61
    %v176 = vmul.f32 %v122, %v62
    %v177 = vmul.f32 %v122, %v63
    %v178 = vmul.f32 %v122, %v64
    %v179 = vmul.f32 %v122, %v65
    %v180 = vmul.f32 %v122, %v66
    %v181 = vmul.f32 %v122, %v67
    %v182 = vmul.f32 %v122, %v68
    %v183 = vmul.f32 %v122, %v69
    %v184 = vmul.f32 %v126, %v54
    %v185 = vmul.f32 %v126, %v55
    %v186 = vmul.f32 %v126, %v56
    %v187 = vmul.f32 %v126, %v57
    %v188 = vmul.f32 %v126, %v58
    %v189 = vmul.f32 %v126, %v59
    %v190 = vmul.f32 %v126, %v60
    %v191 = vmul.f32 %v126, %v61
    %v192 = vmul.f32 %v126, %v62
    %v193 = vmul.f32 %v126, %v63
    %v194 = vmul.f32 %v126, %v64
    %v195 = vmul.f32 %v126, %v65
    %v196 = vmul.f32 %v126, %v66
    %v197 = vmul.f32 %v126, %v67
    %v198 = vmul.f32 %v126, %v68
    %v199 = vmul.f32 %v126, %v69
    %v200 = vmul.f32 %v130, %v54
    %v201 = vmul.f32 %v130, %v55
    %v202 = vmul.f32 %v130, %v56
    %v203 = vmul.f32 %v130, %v57
    %v204 = vmul.f32 %v130, %v58
    %v205 = vmul.f32 %v130, %v59
    %v206 = vmul.f32 %v130, %v60
    %v207 = vmul.f32 %v130, %v61
    %v208 = vmul.f32 %v130, %v62
    %v209 = vmul.f32 %v130, %v63
    %v210 = vmul.f32 %v130, %v64
    %v211 = vmul.f32 %v130, %v65
    %v212 = vmul.f32 %v130, %v66
    %v213 = vmul.f32 %v130, %v67
    %v214 = vmul.f32 %v130, %v68
    %v215 = vmul.f32 %v130, %v69
    %v216 = vld [vmem:[#allocation5] sm:$0xff]
    %v217 = vld [vmem:[#allocation5 + $0x8] sm:$0xff]
    %v218 = vld [vmem:[#allocation5 + $0x10] sm:$0xff]
    %v219 = vld [vmem:[#allocation5 + $0x18] sm:$0xff]
    %v220 = vld [vmem:[#allocation5 + $0x20] sm:$0xff]
    %v221 = vld [vmem:[#allocation5 + $0x28] sm:$0xff]
    %v222 = vld [vmem:[#allocation5 + $0x30] sm:$0xff]
    %v223 = vld [vmem:[#allocation5 + $0x38] sm:$0xff]
    %v224 = vld [vmem:[#allocation5 + $0x40] sm:$0xff]
    %v225 = vld [vmem:[#allocation5 + $0x48] sm:$0xff]
    %v226 = vld [vmem:[#allocation5 + $0x50] sm:$0xff]
    %v227 = vld [vmem:[#allocation5 + $0x58] sm:$0xff]
    %v228 = vld [vmem:[#allocation5 + $0x60] sm:$0xff]
    %v229 = vld [vmem:[#allocation5 + $0x68] sm:$0xff]
    %v230 = vld [vmem:[#allocation5 + $0x70] sm:$0xff]
    %v231 = vld [vmem:[#allocation5 + $0x78] sm:$0xff]
    %232 = vmatprep.subr.mxu0 0.0
    %233 = vmatpush1.msra.mxu0 %v216
    %234 = vmatprep.subr.mxu0 0.0
    %235 = vmatpush1.msra.mxu0 %v217
    %236 = vmatprep.subr.mxu0 0.0
    %237 = vmatpush1.msra.mxu0 %v218
    %238 = vmatprep.subr.mxu0 0.0
    %239 = vmatpush1.msra.mxu0 %v219
    %240 = vmatprep.subr.mxu0 0.0
    %241 = vmatpush1.msra.mxu0 %v220
    %242 = vmatprep.subr.mxu0 0.0
    %243 = vmatpush1.msra.mxu0 %v221
    %244 = vmatprep.subr.mxu0 0.0
    %245 = vmatpush1.msra.mxu0 %v222
    %246 = vmatprep.subr.mxu0 0.0
    %247 = vmatpush1.msra.mxu0 %v223
    %248 = vmatprep.subr.mxu0 0.0
    %249 = vmatpush1.msra.mxu0 %v224
    %250 = vmatprep.subr.mxu0 0.0
    %251 = vmatpush1.msra.mxu0 %v225
    %252 = vmatprep.subr.mxu0 0.0
    %253 = vmatpush1.msra.mxu0 %v226
    %254 = vmatprep.subr.mxu0 0.0
    %255 = vmatpush1.msra.mxu0 %v227
    %256 = vmatprep.subr.mxu0 0.0
    %257 = vmatpush1.msra.mxu0 %v228
    %258 = vmatprep.subr.mxu0 0.0
    %259 = vmatpush1.msra.mxu0 %v229
    %260 = vmatprep.subr.mxu0 0.0
    %261 = vmatpush1.msra.mxu0 %v230
    %262 = vmatprep.subr.mxu0 0.0
    %263 = vmatpush1.msra.mxu0 %v231
    %264 = vmatprep.subr.mxu0 0.0
    %265 = vmatpush1.msra.mxu0 0.0
    %266 = vmatprep.subr.mxu0 0.0
    %267 = vmatpush1.msra.mxu0 0.0
    %268 = vmatprep.subr.mxu0 0.0
    %269 = vmatpush1.msra.mxu0 0.0
    %270 = vmatprep.subr.mxu0 0.0
    %271 = vmatpush1.msra.mxu0 0.0
    %272 = vmatprep.subr.mxu0 0.0
    %273 = vmatpush1.msra.mxu0 0.0
    %274 = vmatprep.subr.mxu0 0.0
    %275 = vmatpush1.msra.mxu0 0.0
    %276 = vmatprep.subr.mxu0 0.0
    %277 = vmatpush1.msra.mxu0 0.0
    %278 = vmatprep.subr.mxu0 0.0
    %279 = vmatpush1.msra.mxu0 0.0
    %280 = vmatprep.subr.mxu0 0.0
    %281 = vmatpush1.msra.mxu0 0.0
    %282 = vmatprep.subr.mxu0 0.0
    %283 = vmatpush1.msra.mxu0 0.0
    %284 = vmatprep.subr.mxu0 0.0
    %285 = vmatpush1.msra.mxu0 0.0
    %286 = vmatprep.subr.mxu0 0.0
    %287 = vmatpush1.msra.mxu0 0.0
    %288 = vmatprep.subr.mxu0 0.0
    %289 = vmatpush1.msra.mxu0 0.0
    %290 = vmatprep.subr.mxu0 0.0
    %291 = vmatpush1.msra.mxu0 0.0
    %292 = vmatprep.subr.mxu0 0.0
    %293 = vmatpush1.msra.mxu0 0.0
    %294 = vmatprep.subr.mxu0 0.0
    %295 = vmatpush1.msra.mxu0 0.0
    %296 = vmatprep.mubr.f32.mxu0 0.0
    %297 = vmatmul.mubr.f32.gmra.mrb[0].mxu0 %v136
    %v298 = vpop.f32.mrb[0].mxu0
    %v299 = vadd.f32 0.0, %v298
    %v300 = vpop.f32.mrb[0].mxu0
    %301 = vmatprep.mubr.f32.mxu0 0.0
    %302 = vmatmul.mubr.f32.gmra.mrb[0].mxu0 %v137
    %v303 = vpop.f32.mrb[0].mxu0
    %v304 = vadd.f32 0.0, %v303
    %v305 = vpop.f32.mrb[0].mxu0
    %306 = vmatprep.mubr.f32.mxu0 0.0
    %307 = vmatmul.mubr.f32.gmra.mrb[0].mxu0 %v138
    %v308 = vpop.f32.mrb[0].mxu0
    %v309 = vadd.f32 0.0, %v308
    %v310 = vpop.f32.mrb[0].mxu0
    %311 = vmatprep.mubr.f32.mxu0 0.0
    %312 = vmatmul.mubr.f32.gmra.mrb[0].mxu0 %v139
    %v313 = vpop.f32.mrb[0].mxu0
    %v314 = vadd.f32 0.0, %v313
    %v315 = vpop.f32.mrb[0].mxu0
    %316 = vmatprep.mubr.f32.mxu0 0.0
    %317 = vmatmul.mubr.f32.gmra.mrb[0].mxu0 %v140
    %v318 = vpop.f32.mrb[0].mxu0
    %v319 = vadd.f32 0.0, %v318
    %v320 = vpop.f32.mrb[0].mxu0
    %321 = vmatprep.mubr.f32.mxu0 0.0
    %322 = vmatmul.mubr.f32.gmra.mrb[0].mxu0 %v141
    %v323 = vpop.f32.mrb[0].mxu0
    %v324 = vadd.f32 0.0, %v323
    %v325 = vpop.f32.mrb[0].mxu0
    %326 = vmatprep.mubr.f32.mxu0 0.0
    %327 = vmatmul.mubr.f32.gmra.mrb[0].mxu0 %v142
    %v328 = vpop.f32.mrb[0].mxu0
    %v329 = vadd.f32 0.0, %v328
    %v330 = vpop.f32.mrb[0].mxu0
    %331 = vmatprep.mubr.f32.mxu0 0.0
    %332 = vmatmul.mubr.f32.gmra.mrb[0].mxu0 %v143
    %v333 = vpop.f32.mrb[0].mxu0
    %v334 = vadd.f32 0.0, %v333
    %v335 = vpop.f32.mrb[0].mxu0
    %336 = vmatprep.mubr.f32.mxu0 0.0
    %337 = vmatmul.mubr.f32.gmra.mrb[0].mxu0 %v144
    %v338 = vpop.f32.mrb[0].mxu0
    %v339 = vadd.f32 0.0, %v338
    %v340 = vpop.f32.mrb[0].mxu0
    %341 = vmatprep.mubr.f32.mxu0 0.0
    %342 = vmatmul.mubr.f32.gmra.mrb[0].mxu0 %v145
    %v343 = vpop.f32.mrb[0].mxu0
    %v344 = vadd.f32 0.0, %v343
    %v345 = vpop.f32.mrb[0].mxu0
    %346 = vmatprep.mubr.f32.mxu0 0.0
    %347 = vmatmul.mubr.f32.gmra.mrb[0].mxu0 %v146
    %v348 = vpop.f32.mrb[0].mxu0
    %v349 = vadd.f32 0.0, %v348
    %v350 = vpop.f32.mrb[0].mxu0
    %351 = vmatprep.mubr.f32.mxu0 0.0
    %352 = vmatmul.mubr.f32.gmra.mrb[0].mxu0 %v147
    %v353 = vpop.f32.mrb[0].mxu0
    %v354 = vadd.f32 0.0, %v353
    %v355 = vpop.f32.mrb[0].mxu0
    %356 = vmatprep.mubr.f32.mxu0 0.0
    %357 = vmatmul.mubr.f32.gmra.mrb[0].mxu0 %v148
    %v358 = vpop.f32.mrb[0].mxu0
    %v359 = vadd.f32 0.0, %v358
    %v360 = vpop.f32.mrb[0].mxu0
    %361 = vmatprep.mubr.f32.mxu0 0.0
    %362 = vmatmul.mubr.f32.gmra.mrb[0].mxu0 %v149
    %v363 = vpop.f32.mrb[0].mxu0
    %v364 = vadd.f32 0.0, %v363
    %v365 = vpop.f32.mrb[0].mxu0
    %366 = vmatprep.mubr.f32.mxu0 0.0
    %367 = vmatmul.mubr.f32.gmra.mrb[0].mxu0 %v150
    %v368 = vpop.f32.mrb[0].mxu0
    %v369 = vadd.f32 0.0, %v368
    %v370 = vpop.f32.mrb[0].mxu0
    %371 = vmatprep.mubr.f32.mxu0 0.0
    %372 = vmatmul.mubr.f32.gmra.mrb[0].mxu0 %v151
    %v373 = vpop.f32.mrb[0].mxu0
    %v374 = vadd.f32 0.0, %v373
    %v375 = vpop.f32.mrb[0].mxu0
    %376 = vmatprep.mubr.f32.mxu0 0.0
    %377 = vmatmul.mubr.f32.gmra.mrb[0].mxu0 %v152
    %v378 = vpop.f32.mrb[0].mxu0
    %v379 = vadd.f32 0.0, %v378
    %v380 = vpop.f32.mrb[0].mxu0
    %381 = vmatprep.mubr.f32.mxu0 0.0
    %382 = vmatmul.mubr.f32.gmra.mrb[0].mxu0 %v153
    %v383 = vpop.f32.mrb[0].mxu0
    %v384 = vadd.f32 0.0, %v383
    %v385 = vpop.f32.mrb[0].mxu0
    %386 = vmatprep.mubr.f32.mxu0 0.0
    %387 = vmatmul.mubr.f32.gmra.mrb[0].mxu0 %v154
    %v388 = vpop.f32.mrb[0].mxu0
    %v389 = vadd.f32 0.0, %v388
    %v390 = vpop.f32.mrb[0].mxu0
    %391 = vmatprep.mubr.f32.mxu0 0.0
    %392 = vmatmul.mubr.f32.gmra.mrb[0].mxu0 %v155
    %v393 = vpop.f32.mrb[0].mxu0
    %v394 = vadd.f32 0.0, %v393
    %v395 = vpop.f32.mrb[0].mxu0
    %396 = vmatprep.mubr.f32.mxu0 0.0
    %397 = vmatmul.mubr.f32.gmra.mrb[0].mxu0 %v156
    %v398 = vpop.f32.mrb[0].mxu0
    %v399 = vadd.f32 0.0, %v398
    %v400 = vpop.f32.mrb[0].mxu0
    %401 = vmatprep.mubr.f32.mxu0 0.0
    %402 = vmatmul.mubr.f32.gmra.mrb[0].mxu0 %v157
    %v403 = vpop.f32.mrb[0].mxu0
    %v404 = vadd.f32 0.0, %v403
    %v405 = vpop.f32.mrb[0].mxu0
    %406 = vmatprep.mubr.f32.mxu0 0.0
    %407 = vmatmul.mubr.f32.gmra.mrb[0].mxu0 %v158
    %v408 = vpop.f32.mrb[0].mxu0
    %v409 = vadd.f32 0.0, %v408
    %v410 = vpop.f32.mrb[0].mxu0
    %411 = vmatprep.mubr.f32.mxu0 0.0
    %412 = vmatmul.mubr.f32.gmra.mrb[0].mxu0 %v159
    %v413 = vpop.f32.mrb[0].mxu0
    %v414 = vadd.f32 0.0, %v413
    %v415 = vpop.f32.mrb[0].mxu0
    %416 = vmatprep.mubr.f32.mxu0 0.0
    %417 = vmatmul.mubr.f32.gmra.mrb[0].mxu0 %v160
    %v418 = vpop.f32.mrb[0].mxu0
    %v419 = vadd.f32 0.0, %v418
    %v420 = vpop.f32.mrb[0].mxu0
    %421 = vmatprep.mubr.f32.mxu0 0.0
    %422 = vmatmul.mubr.f32.gmra.mrb[0].mxu0 %v161
    %v423 = vpop.f32.mrb[0].mxu0
    %v424 = vadd.f32 0.0, %v423
    %v425 = vpop.f32.mrb[0].mxu0
    %426 = vmatprep.mubr.f32.mxu0 0.0
    %427 = vmatmul.mubr.f32.gmra.mrb[0].mxu0 %v162
    %v428 = vpop.f32.mrb[0].mxu0
    %v429 = vadd.f32 0.0, %v428
    %v430 = vpop.f32.mrb[0].mxu0
    %431 = vmatprep.mubr.f32.mxu0 0.0
    %432 = vmatmul.mubr.f32.gmra.mrb[0].mxu0 %v163
    %v433 = vpop.f32.mrb[0].mxu0
    %v434 = vadd.f32 0.0, %v433
    %v435 = vpop.f32.mrb[0].mxu0
    %436 = vmatprep.mubr.f32.mxu0 0.0
    %437 = vmatmul.mubr.f32.gmra.mrb[0].mxu0 %v164
    %v438 = vpop.f32.mrb[0].mxu0
    %v439 = vadd.f32 0.0, %v438
    %v440 = vpop.f32.mrb[0].mxu0
    %441 = vmatprep.mubr.f32.mxu0 0.0
    %442 = vmatmul.mubr.f32.gmra.mrb[0].mxu0 %v165
    %v443 = vpop.f32.mrb[0].mxu0
    %v444 = vadd.f32 0.0, %v443
    %v445 = vpop.f32.mrb[0].mxu0
    %446 = vmatprep.mubr.f32.mxu0 0.0
    %447 = vmatmul.mubr.f32.gmra.mrb[0].mxu0 %v166
    %v448 = vpop.f32.mrb[0].mxu0
    %v449 = vadd.f32 0.0, %v448
    %v450 = vpop.f32.mrb[0].mxu0
    %451 = vmatprep.mubr.f32.mxu0 0.0
    %452 = vmatmul.mubr.f32.gmra.mrb[0].mxu0 %v167
    %v453 = vpop.f32.mrb[0].mxu0
    %v454 = vadd.f32 0.0, %v453
    %v455 = vpop.f32.mrb[0].mxu0
    %456 = vmatprep.mubr.f32.mxu0 0.0
    %457 = vmatmul.mubr.f32.gmra.mrb[0].mxu0 %v168
    %v458 = vpop.f32.mrb[0].mxu0
    %v459 = vadd.f32 0.0, %v458
    %v460 = vpop.f32.mrb[0].mxu0
    %461 = vmatprep.mubr.f32.mxu0 0.0
    %462 = vmatmul.mubr.f32.gmra.mrb[0].mxu0 %v169
    %v463 = vpop.f32.mrb[0].mxu0
    %v464 = vadd.f32 0.0, %v463
    %v465 = vpop.f32.mrb[0].mxu0
    %466 = vmatprep.mubr.f32.mxu0 0.0
    %467 = vmatmul.mubr.f32.gmra.mrb[0].mxu0 %v170
    %v468 = vpop.f32.mrb[0].mxu0
    %v469 = vadd.f32 0.0, %v468
    %v470 = vpop.f32.mrb[0].mxu0
    %471 = vmatprep.mubr.f32.mxu0 0.0
    %472 = vmatmul.mubr.f32.gmra.mrb[0].mxu0 %v171
    %v473 = vpop.f32.mrb[0].mxu0
    %v474 = vadd.f32 0.0, %v473
    %v475 = vpop.f32.mrb[0].mxu0
    %476 = vmatprep.mubr.f32.mxu0 0.0
    %477 = vmatmul.mubr.f32.gmra.mrb[0].mxu0 %v172
    %v478 = vpop.f32.mrb[0].mxu0
    %v479 = vadd.f32 0.0, %v478
    %v480 = vpop.f32.mrb[0].mxu0
    %481 = vmatprep.mubr.f32.mxu0 0.0
    %482 = vmatmul.mubr.f32.gmra.mrb[0].mxu0 %v173
    %v483 = vpop.f32.mrb[0].mxu0
    %v484 = vadd.f32 0.0, %v483
    %v485 = vpop.f32.mrb[0].mxu0
    %486 = vmatprep.mubr.f32.mxu0 0.0
    %487 = vmatmul.mubr.f32.gmra.mrb[0].mxu0 %v174
    %v488 = vpop.f32.mrb[0].mxu0
    %v489 = vadd.f32 0.0, %v488
    %v490 = vpop.f32.mrb[0].mxu0
    %491 = vmatprep.mubr.f32.mxu0 0.0
    %492 = vmatmul.mubr.f32.gmra.mrb[0].mxu0 %v175
    %v493 = vpop.f32.mrb[0].mxu0
    %v494 = vadd.f32 0.0, %v493
    %v495 = vpop.f32.mrb[0].mxu0
    %496 = vmatprep.mubr.f32.mxu0 0.0
    %497 = vmatmul.mubr.f32.gmra.mrb[0].mxu0 %v176
    %v498 = vpop.f32.mrb[0].mxu0
    %v499 = vadd.f32 0.0, %v498
    %v500 = vpop.f32.mrb[0].mxu0
    %501 = vmatprep.mubr.f32.mxu0 0.0
    %502 = vmatmul.mubr.f32.gmra.mrb[0].mxu0 %v177
    %v503 = vpop.f32.mrb[0].mxu0
    %v504 = vadd.f32 0.0, %v503
    %v505 = vpop.f32.mrb[0].mxu0
    %506 = vmatprep.mubr.f32.mxu0 0.0
    %507 = vmatmul.mubr.f32.gmra.mrb[0].mxu0 %v178
    %v508 = vpop.f32.mrb[0].mxu0
    %v509 = vadd.f32 0.0, %v508
    %v510 = vpop.f32.mrb[0].mxu0
    %511 = vmatprep.mubr.f32.mxu0 0.0
    %512 = vmatmul.mubr.f32.gmra.mrb[0].mxu0 %v179
    %v513 = vpop.f32.mrb[0].mxu0
    %v514 = vadd.f32 0.0, %v513
    %v515 = vpop.f32.mrb[0].mxu0
    %516 = vmatprep.mubr.f32.mxu0 0.0
    %517 = vmatmul.mubr.f32.gmra.mrb[0].mxu0 %v180
    %v518 = vpop.f32.mrb[0].mxu0
    %v519 = vadd.f32 0.0, %v518
    %v520 = vpop.f32.mrb[0].mxu0
    %521 = vmatprep.mubr.f32.mxu0 0.0
    %522 = vmatmul.mubr.f32.gmra.mrb[0].mxu0 %v181
    %v523 = vpop.f32.mrb[0].mxu0
    %v524 = vadd.f32 0.0, %v523
    %v525 = vpop.f32.mrb[0].mxu0
    %526 = vmatprep.mubr.f32.mxu0 0.0
    %527 = vmatmul.mubr.f32.gmra.mrb[0].mxu0 %v182
    %v528 = vpop.f32.mrb[0].mxu0
    %v529 = vadd.f32 0.0, %v528
    %v530 = vpop.f32.mrb[0].mxu0
    %531 = vmatprep.mubr.f32.mxu0 0.0
    %532 = vmatmul.mubr.f32.gmra.mrb[0].mxu0 %v183
    %v533 = vpop.f32.mrb[0].mxu0
    %v534 = vadd.f32 0.0, %v533
    %v535 = vpop.f32.mrb[0].mxu0
    %536 = vmatprep.mubr.f32.mxu0 0.0
    %537 = vmatmul.mubr.f32.gmra.mrb[0].mxu0 %v184
    %v538 = vpop.f32.mrb[0].mxu0
    %v539 = vadd.f32 0.0, %v538
    %v540 = vpop.f32.mrb[0].mxu0
    %541 = vmatprep.mubr.f32.mxu0 0.0
    %542 = vmatmul.mubr.f32.gmra.mrb[0].mxu0 %v185
    %v543 = vpop.f32.mrb[0].mxu0
    %v544 = vadd.f32 0.0, %v543
    %v545 = vpop.f32.mrb[0].mxu0
    %546 = vmatprep.mubr.f32.mxu0 0.0
    %547 = vmatmul.mubr.f32.gmra.mrb[0].mxu0 %v186
    %v548 = vpop.f32.mrb[0].mxu0
    %v549 = vadd.f32 0.0, %v548
    %v550 = vpop.f32.mrb[0].mxu0
    %551 = vmatprep.mubr.f32.mxu0 0.0
    %552 = vmatmul.mubr.f32.gmra.mrb[0].mxu0 %v187
    %v553 = vpop.f32.mrb[0].mxu0
    %v554 = vadd.f32 0.0, %v553
    %v555 = vpop.f32.mrb[0].mxu0
    %556 = vmatprep.mubr.f32.mxu0 0.0
    %557 = vmatmul.mubr.f32.gmra.mrb[0].mxu0 %v188
    %v558 = vpop.f32.mrb[0].mxu0
    %v559 = vadd.f32 0.0, %v558
    %v560 = vpop.f32.mrb[0].mxu0
    %561 = vmatprep.mubr.f32.mxu0 0.0
    %562 = vmatmul.mubr.f32.gmra.mrb[0].mxu0 %v189
    %v563 = vpop.f32.mrb[0].mxu0
    %v564 = vadd.f32 0.0, %v563
    %v565 = vpop.f32.mrb[0].mxu0
    %566 = vmatprep.mubr.f32.mxu0 0.0
    %567 = vmatmul.mubr.f32.gmra.mrb[0].mxu0 %v190
    %v568 = vpop.f32.mrb[0].mxu0
    %v569 = vadd.f32 0.0, %v568
    %v570 = vpop.f32.mrb[0].mxu0
    %571 = vmatprep.mubr.f32.mxu0 0.0
    %572 = vmatmul.mubr.f32.gmra.mrb[0].mxu0 %v191
    %v573 = vpop.f32.mrb[0].mxu0
    %v574 = vadd.f32 0.0, %v573
    %v575 = vpop.f32.mrb[0].mxu0
    %576 = vmatprep.mubr.f32.mxu0 0.0
    %577 = vmatmul.mubr.f32.gmra.mrb[0].mxu0 %v192
    %v578 = vpop.f32.mrb[0].mxu0
    %v579 = vadd.f32 0.0, %v578
    %v580 = vpop.f32.mrb[0].mxu0
    %581 = vmatprep.mubr.f32.mxu0 0.0
    %582 = vmatmul.mubr.f32.gmra.mrb[0].mxu0 %v193
    %v583 = vpop.f32.mrb[0].mxu0
    %v584 = vadd.f32 0.0, %v583
    %v585 = vpop.f32.mrb[0].mxu0
    %586 = vmatprep.mubr.f32.mxu0 0.0
    %587 = vmatmul.mubr.f32.gmra.mrb[0].mxu0 %v194
    %v588 = vpop.f32.mrb[0].mxu0
    %v589 = vadd.f32 0.0, %v588
    %v590 = vpop.f32.mrb[0].mxu0
    %591 = vmatprep.mubr.f32.mxu0 0.0
    %592 = vmatmul.mubr.f32.gmra.mrb[0].mxu0 %v195
    %v593 = vpop.f32.mrb[0].mxu0
    %v594 = vadd.f32 0.0, %v593
    %v595 = vpop.f32.mrb[0].mxu0
    %596 = vmatprep.mubr.f32.mxu0 0.0
    %597 = vmatmul.mubr.f32.gmra.mrb[0].mxu0 %v196
    %v598 = vpop.f32.mrb[0].mxu0
    %v599 = vadd.f32 0.0, %v598
    %v600 = vpop.f32.mrb[0].mxu0
    %601 = vmatprep.mubr.f32.mxu0 0.0
    %602 = vmatmul.mubr.f32.gmra.mrb[0].mxu0 %v197
    %v603 = vpop.f32.mrb[0].mxu0
    %v604 = vadd.f32 0.0, %v603
    %v605 = vpop.f32.mrb[0].mxu0
    %606 = vmatprep.mubr.f32.mxu0 0.0
    %607 = vmatmul.mubr.f32.gmra.mrb[0].mxu0 %v198
    %v608 = vpop.f32.mrb[0].mxu0
    %v609 = vadd.f32 0.0, %v608
    %v610 = vpop.f32.mrb[0].mxu0
    %611 = vmatprep.mubr.f32.mxu0 0.0
    %612 = vmatmul.mubr.f32.gmra.mrb[0].mxu0 %v199
    %v613 = vpop.f32.mrb[0].mxu0
    %v614 = vadd.f32 0.0, %v613
    %v615 = vpop.f32.mrb[0].mxu0
    %616 = vmatprep.mubr.f32.mxu0 0.0
    %617 = vmatmul.mubr.f32.gmra.mrb[0].mxu0 %v200
    %v618 = vpop.f32.mrb[0].mxu0
    %v619 = vadd.f32 0.0, %v618
    %v620 = vpop.f32.mrb[0].mxu0
    %621 = vmatprep.mubr.f32.mxu0 0.0
    %622 = vmatmul.mubr.f32.gmra.mrb[0].mxu0 %v201
    %v623 = vpop.f32.mrb[0].mxu0
    %v624 = vadd.f32 0.0, %v623
    %v625 = vpop.f32.mrb[0].mxu0
    %626 = vmatprep.mubr.f32.mxu0 0.0
    %627 = vmatmul.mubr.f32.gmra.mrb[0].mxu0 %v202
    %v628 = vpop.f32.mrb[0].mxu0
    %v629 = vadd.f32 0.0, %v628
    %v630 = vpop.f32.mrb[0].mxu0
    %631 = vmatprep.mubr.f32.mxu0 0.0
    %632 = vmatmul.mubr.f32.gmra.mrb[0].mxu0 %v203
    %v633 = vpop.f32.mrb[0].mxu0
    %v634 = vadd.f32 0.0, %v633
    %v635 = vpop.f32.mrb[0].mxu0
    %636 = vmatprep.mubr.f32.mxu0 0.0
    %637 = vmatmul.mubr.f32.gmra.mrb[0].mxu0 %v204
    %v638 = vpop.f32.mrb[0].mxu0
    %v639 = vadd.f32 0.0, %v638
    %v640 = vpop.f32.mrb[0].mxu0
    %641 = vmatprep.mubr.f32.mxu0 0.0
    %642 = vmatmul.mubr.f32.gmra.mrb[0].mxu0 %v205
    %v643 = vpop.f32.mrb[0].mxu0
    %v644 = vadd.f32 0.0, %v643
    %v645 = vpop.f32.mrb[0].mxu0
    %646 = vmatprep.mubr.f32.mxu0 0.0
    %647 = vmatmul.mubr.f32.gmra.mrb[0].mxu0 %v206
    %v648 = vpop.f32.mrb[0].mxu0
    %v649 = vadd.f32 0.0, %v648
    %v650 = vpop.f32.mrb[0].mxu0
    %651 = vmatprep.mubr.f32.mxu0 0.0
    %652 = vmatmul.mubr.f32.gmra.mrb[0].mxu0 %v207
    %v653 = vpop.f32.mrb[0].mxu0
    %v654 = vadd.f32 0.0, %v653
    %v655 = vpop.f32.mrb[0].mxu0
    %656 = vmatprep.mubr.f32.mxu0 0.0
    %657 = vmatmul.mubr.f32.gmra.mrb[0].mxu0 %v208
    %v658 = vpop.f32.mrb[0].mxu0
    %v659 = vadd.f32 0.0, %v658
    %v660 = vpop.f32.mrb[0].mxu0
    %661 = vmatprep.mubr.f32.mxu0 0.0
    %662 = vmatmul.mubr.f32.gmra.mrb[0].mxu0 %v209
    %v663 = vpop.f32.mrb[0].mxu0
    %v664 = vadd.f32 0.0, %v663
    %v665 = vpop.f32.mrb[0].mxu0
    %666 = vmatprep.mubr.f32.mxu0 0.0
    %667 = vmatmul.mubr.f32.gmra.mrb[0].mxu0 %v210
    %v668 = vpop.f32.mrb[0].mxu0
    %v669 = vadd.f32 0.0, %v668
    %v670 = vpop.f32.mrb[0].mxu0
    %671 = vmatprep.mubr.f32.mxu0 0.0
    %672 = vmatmul.mubr.f32.gmra.mrb[0].mxu0 %v211
    %v673 = vpop.f32.mrb[0].mxu0
    %v674 = vadd.f32 0.0, %v673
    %v675 = vpop.f32.mrb[0].mxu0
    %676 = vmatprep.mubr.f32.mxu0 0.0
    %677 = vmatmul.mubr.f32.gmra.mrb[0].mxu0 %v212
    %v678 = vpop.f32.mrb[0].mxu0
    %v679 = vadd.f32 0.0, %v678
    %v680 = vpop.f32.mrb[0].mxu0
    %681 = vmatprep.mubr.f32.mxu0 0.0
    %682 = vmatmul.mubr.f32.gmra.mrb[0].mxu0 %v213
    %v683 = vpop.f32.mrb[0].mxu0
    %v684 = vadd.f32 0.0, %v683
    %v685 = vpop.f32.mrb[0].mxu0
    %686 = vmatprep.mubr.f32.mxu0 0.0
    %687 = vmatmul.mubr.f32.gmra.mrb[0].mxu0 %v214
    %v688 = vpop.f32.mrb[0].mxu0
    %v689 = vadd.f32 0.0, %v688
    %v690 = vpop.f32.mrb[0].mxu0
    %691 = vmatprep.mubr.f32.mxu0 0.0
    %692 = vmatmul.mubr.f32.gmra.mrb[0].mxu0 %v215
    %v693 = vpop.f32.mrb[0].mxu0
    %v694 = vadd.f32 0.0, %v693
    %v695 = vpop.f32.mrb[0].mxu0
    %696 = vdwg.mxu0
    %p697 = scmp.eq.s32.totalorder 0, 0
    // Predicated region
    $region26: #{tpu_custom_call.1} parent=1 // pred_check
      %p698 = pneg %p697
    $region27: #{tpu_custom_call.1} parent=1 // pred_check_branch
      %700 = sbr.rel (%p698) target = $region29
    $region28: #{tpu_custom_call.1} parent=1 // pred_region
      %701 = vst [vmem:[#allocation8] sm:$0xff] %v299
      %702 = vst [vmem:[#allocation8 + $0x8] sm:$0xff] %v304
      %703 = vst [vmem:[#allocation8 + $0x10] sm:$0xff] %v309
      %704 = vst [vmem:[#allocation8 + $0x18] sm:$0xff] %v314
      %705 = vst [vmem:[#allocation8 + $0x20] sm:$0xff] %v319
      %706 = vst [vmem:[#allocation8 + $0x28] sm:$0xff] %v324
      %707 = vst [vmem:[#allocation8 + $0x30] sm:$0xff] %v329
      %708 = vst [vmem:[#allocation8 + $0x38] sm:$0xff] %v334
      %709 = vst [vmem:[#allocation8 + $0x40] sm:$0xff] %v339
      %710 = vst [vmem:[#allocation8 + $0x48] sm:$0xff] %v344
      %711 = vst [vmem:[#allocation8 + $0x50] sm:$0xff] %v349
      %712 = vst [vmem:[#allocation8 + $0x58] sm:$0xff] %v354
      %713 = vst [vmem:[#allocation8 + $0x60] sm:$0xff] %v359
      %714 = vst [vmem:[#allocation8 + $0x68] sm:$0xff] %v364
      %715 = vst [vmem:[#allocation8 + $0x70] sm:$0xff] %v369
      %716 = vst [vmem:[#allocation8 + $0x78] sm:$0xff] %v374
      %717 = vst [vmem:[#allocation8 + $0x80] sm:$0xff] %v379
      %718 = vst [vmem:[#allocation8 + $0x88] sm:$0xff] %v384
      %719 = vst [vmem:[#allocation8 + $0x90] sm:$0xff] %v389
      %720 = vst [vmem:[#allocation8 + $0x98] sm:$0xff] %v394
      %721 = vst [vmem:[#allocation8 + $0xa0] sm:$0xff] %v399
      %722 = vst [vmem:[#allocation8 + $0xa8] sm:$0xff] %v404
      %723 = vst [vmem:[#allocation8 + $0xb0] sm:$0xff] %v409
      %724 = vst [vmem:[#allocation8 + $0xb8] sm:$0xff] %v414
      %725 = vst [vmem:[#allocation8 + $0xc0] sm:$0xff] %v419
      %726 = vst [vmem:[#allocation8 + $0xc8] sm:$0xff] %v424
      %727 = vst [vmem:[#allocation8 + $0xd0] sm:$0xff] %v429
      %728 = vst [vmem:[#allocation8 + $0xd8] sm:$0xff] %v434
      %729 = vst [vmem:[#allocation8 + $0xe0] sm:$0xff] %v439
      %730 = vst [vmem:[#allocation8 + $0xe8] sm:$0xff] %v444
      %731 = vst [vmem:[#allocation8 + $0xf0] sm:$0xff] %v449
      %732 = vst [vmem:[#allocation8 + $0xf8] sm:$0xff] %v454
      %733 = vst [vmem:[#allocation8 + $0x100] sm:$0xff] %v459
      %734 = vst [vmem:[#allocation8 + $0x108] sm:$0xff] %v464
      %735 = vst [vmem:[#allocation8 + $0x110] sm:$0xff] %v469
      %736 = vst [vmem:[#allocation8 + $0x118] sm:$0xff] %v474
      %737 = vst [vmem:[#allocation8 + $0x120] sm:$0xff] %v479
      %738 = vst [vmem:[#allocation8 + $0x128] sm:$0xff] %v484
      %739 = vst [vmem:[#allocation8 + $0x130] sm:$0xff] %v489
      %740 = vst [vmem:[#allocation8 + $0x138] sm:$0xff] %v494
      %741 = vst [vmem:[#allocation8 + $0x140] sm:$0xff] %v499
      %742 = vst [vmem:[#allocation8 + $0x148] sm:$0xff] %v504
      %743 = vst [vmem:[#allocation8 + $0x150] sm:$0xff] %v509
      %744 = vst [vmem:[#allocation8 + $0x158] sm:$0xff] %v514
      %745 = vst [vmem:[#allocation8 + $0x160] sm:$0xff] %v519
      %746 = vst [vmem:[#allocation8 + $0x168] sm:$0xff] %v524
      %747 = vst [vmem:[#allocation8 + $0x170] sm:$0xff] %v529
      %748 = vst [vmem:[#allocation8 + $0x178] sm:$0xff] %v534
      %749 = vst [vmem:[#allocation8 + $0x180] sm:$0xff] %v539
      %750 = vst [vmem:[#allocation8 + $0x188] sm:$0xff] %v544
      %751 = vst [vmem:[#allocation8 + $0x190] sm:$0xff] %v549
      %752 = vst [vmem:[#allocation8 + $0x198] sm:$0xff] %v554
      %753 = vst [vmem:[#allocation8 + $0x1a0] sm:$0xff] %v559
      %754 = vst [vmem:[#allocation8 + $0x1a8] sm:$0xff] %v564
      %755 = vst [vmem:[#allocation8 + $0x1b0] sm:$0xff] %v569
      %756 = vst [vmem:[#allocation8 + $0x1b8] sm:$0xff] %v574
      %757 = vst [vmem:[#allocation8 + $0x1c0] sm:$0xff] %v579
      %758 = vst [vmem:[#allocation8 + $0x1c8] sm:$0xff] %v584
      %759 = vst [vmem:[#allocation8 + $0x1d0] sm:$0xff] %v589
      %760 = vst [vmem:[#allocation8 + $0x1d8] sm:$0xff] %v594
      %761 = vst [vmem:[#allocation8 + $0x1e0] sm:$0xff] %v599
      %762 = vst [vmem:[#allocation8 + $0x1e8] sm:$0xff] %v604
      %763 = vst [vmem:[#allocation8 + $0x1f0] sm:$0xff] %v609
      %764 = vst [vmem:[#allocation8 + $0x1f8] sm:$0xff] %v614
      %765 = vst [vmem:[#allocation8 + $0x200] sm:$0xff] %v619
      %766 = vst [vmem:[#allocation8 + $0x208] sm:$0xff] %v624
      %767 = vst [vmem:[#allocation8 + $0x210] sm:$0xff] %v629
      %768 = vst [vmem:[#allocation8 + $0x218] sm:$0xff] %v634
      %769 = vst [vmem:[#allocation8 + $0x220] sm:$0xff] %v639
      %770 = vst [vmem:[#allocation8 + $0x228] sm:$0xff] %v644
      %771 = vst [vmem:[#allocation8 + $0x230] sm:$0xff] %v649
      %772 = vst [vmem:[#allocation8 + $0x238] sm:$0xff] %v654
      %773 = vst [vmem:[#allocation8 + $0x240] sm:$0xff] %v659
      %774 = vst [vmem:[#allocation8 + $0x248] sm:$0xff] %v664
      %775 = vst [vmem:[#allocation8 + $0x250] sm:$0xff] %v669
      %776 = vst [vmem:[#allocation8 + $0x258] sm:$0xff] %v674
      %777 = vst [vmem:[#allocation8 + $0x260] sm:$0xff] %v679
      %778 = vst [vmem:[#allocation8 + $0x268] sm:$0xff] %v684
      %779 = vst [vmem:[#allocation8 + $0x270] sm:$0xff] %v689
      %780 = vst [vmem:[#allocation8 + $0x278] sm:$0xff] %v694
    $region29: #{tpu_custom_call.1} parent=1 // pred_fallthru
      _
    %p781 = scmp.ne.s32.totalorder 0, 0
    // Predicated region
    $region30: #{tpu_custom_call.1} parent=1 // pred_check
      %p782 = pneg %p781
    $region31: #{tpu_custom_call.1} parent=1 // pred_check_branch
      %784 = sbr.rel (%p782) target = $region33
    $region32: #{tpu_custom_call.1} parent=1 // pred_region
      %v785 = vld [vmem:[#allocation8] sm:$0xff]
      %v786 = vld [vmem:[#allocation8 + $0x8] sm:$0xff]
      %v787 = vld [vmem:[#allocation8 + $0x10] sm:$0xff]
      %v788 = vld [vmem:[#allocation8 + $0x18] sm:$0xff]
      %v789 = vld [vmem:[#allocation8 + $0x20] sm:$0xff]
      %v790 = vld [vmem:[#allocation8 + $0x28] sm:$0xff]
      %v791 = vld [vmem:[#allocation8 + $0x30] sm:$0xff]
      %v792 = vld [vmem:[#allocation8 + $0x38] sm:$0xff]
      %v793 = vld [vmem:[#allocation8 + $0x40] sm:$0xff]
      %v794 = vld [vmem:[#allocation8 + $0x48] sm:$0xff]
      %v795 = vld [vmem:[#allocation8 + $0x50] sm:$0xff]
      %v796 = vld [vmem:[#allocation8 + $0x58] sm:$0xff]
      %v797 = vld [vmem:[#allocation8 + $0x60] sm:$0xff]
      %v798 = vld [vmem:[#allocation8 + $0x68] sm:$0xff]
      %v799 = vld [vmem:[#allocation8 + $0x70] sm:$0xff]
      %v800 = vld [vmem:[#allocation8 + $0x78] sm:$0xff]
      %v801 = vld [vmem:[#allocation8 + $0x80] sm:$0xff]
      %v802 = vld [vmem:[#allocation8 + $0x88] sm:$0xff]
      %v803 = vld [vmem:[#allocation8 + $0x90] sm:$0xff]
      %v804 = vld [vmem:[#allocation8 + $0x98] sm:$0xff]
      %v805 = vld [vmem:[#allocation8 + $0xa0] sm:$0xff]
      %v806 = vld [vmem:[#allocation8 + $0xa8] sm:$0xff]
      %v807 = vld [vmem:[#allocation8 + $0xb0] sm:$0xff]
      %v808 = vld [vmem:[#allocation8 + $0xb8] sm:$0xff]
      %v809 = vld [vmem:[#allocation8 + $0xc0] sm:$0xff]
      %v810 = vld [vmem:[#allocation8 + $0xc8] sm:$0xff]
      %v811 = vld [vmem:[#allocation8 + $0xd0] sm:$0xff]
      %v812 = vld [vmem:[#allocation8 + $0xd8] sm:$0xff]
      %v813 = vld [vmem:[#allocation8 + $0xe0] sm:$0xff]
      %v814 = vld [vmem:[#allocation8 + $0xe8] sm:$0xff]
      %v815 = vld [vmem:[#allocation8 + $0xf0] sm:$0xff]
      %v816 = vld [vmem:[#allocation8 + $0xf8] sm:$0xff]
      %v817 = vld [vmem:[#allocation8 + $0x100] sm:$0xff]
      %v818 = vld [vmem:[#allocation8 + $0x108] sm:$0xff]
      %v819 = vld [vmem:[#allocation8 + $0x110] sm:$0xff]
      %v820 = vld [vmem:[#allocation8 + $0x118] sm:$0xff]
      %v821 = vld [vmem:[#allocation8 + $0x120] sm:$0xff]
      %v822 = vld [vmem:[#allocation8 + $0x128] sm:$0xff]
      %v823 = vld [vmem:[#allocation8 + $0x130] sm:$0xff]
      %v824 = vld [vmem:[#allocation8 + $0x138] sm:$0xff]
      %v825 = vld [vmem:[#allocation8 + $0x140] sm:$0xff]
      %v826 = vld [vmem:[#allocation8 + $0x148] sm:$0xff]
      %v827 = vld [vmem:[#allocation8 + $0x150] sm:$0xff]
      %v828 = vld [vmem:[#allocation8 + $0x158] sm:$0xff]
      %v829 = vld [vmem:[#allocation8 + $0x160] sm:$0xff]
      %v830 = vld [vmem:[#allocation8 + $0x168] sm:$0xff]
      %v831 = vld [vmem:[#allocation8 + $0x170] sm:$0xff]
      %v832 = vld [vmem:[#allocation8 + $0x178] sm:$0xff]
      %v833 = vld [vmem:[#allocation8 + $0x180] sm:$0xff]
      %v834 = vld [vmem:[#allocation8 + $0x188] sm:$0xff]
      %v835 = vld [vmem:[#allocation8 + $0x190] sm:$0xff]
      %v836 = vld [vmem:[#allocation8 + $0x198] sm:$0xff]
      %v837 = vld [vmem:[#allocation8 + $0x1a0] sm:$0xff]
      %v838 = vld [vmem:[#allocation8 + $0x1a8] sm:$0xff]
      %v839 = vld [vmem:[#allocation8 + $0x1b0] sm:$0xff]
      %v840 = vld [vmem:[#allocation8 + $0x1b8] sm:$0xff]
      %v841 = vld [vmem:[#allocation8 + $0x1c0] sm:$0xff]
      %v842 = vld [vmem:[#allocation8 + $0x1c8] sm:$0xff]
      %v843 = vld [vmem:[#allocation8 + $0x1d0] sm:$0xff]
      %v844 = vld [vmem:[#allocation8 + $0x1d8] sm:$0xff]
      %v845 = vld [vmem:[#allocation8 + $0x1e0] sm:$0xff]
      %v846 = vld [vmem:[#allocation8 + $0x1e8] sm:$0xff]
      %v847 = vld [vmem:[#allocation8 + $0x1f0] sm:$0xff]
      %v848 = vld [vmem:[#allocation8 + $0x1f8] sm:$0xff]
      %v849 = vld [vmem:[#allocation8 + $0x200] sm:$0xff]
      %v850 = vld [vmem:[#allocation8 + $0x208] sm:$0xff]
      %v851 = vld [vmem:[#allocation8 + $0x210] sm:$0xff]
      %v852 = vld [vmem:[#allocation8 + $0x218] sm:$0xff]
      %v853 = vld [vmem:[#allocation8 + $0x220] sm:$0xff]
      %v854 = vld [vmem:[#allocation8 + $0x228] sm:$0xff]
      %v855 = vld [vmem:[#allocation8 + $0x230] sm:$0xff]
      %v856 = vld [vmem:[#allocation8 + $0x238] sm:$0xff]
      %v857 = vld [vmem:[#allocation8 + $0x240] sm:$0xff]
      %v858 = vld [vmem:[#allocation8 + $0x248] sm:$0xff]
      %v859 = vld [vmem:[#allocation8 + $0x250] sm:$0xff]
      %v860 = vld [vmem:[#allocation8 + $0x258] sm:$0xff]
      %v861 = vld [vmem:[#allocation8 + $0x260] sm:$0xff]
      %v862 = vld [vmem:[#allocation8 + $0x268] sm:$0xff]
      %v863 = vld [vmem:[#allocation8 + $0x270] sm:$0xff]
      %v864 = vld [vmem:[#allocation8 + $0x278] sm:$0xff]
      %v865 = vadd.f32 %v785, %v299
      %v866 = vadd.f32 %v786, %v304
      %v867 = vadd.f32 %v787, %v309
      %v868 = vadd.f32 %v788, %v314
      %v869 = vadd.f32 %v789, %v319
      %v870 = vadd.f32 %v790, %v324
      %v871 = vadd.f32 %v791, %v329
      %v872 = vadd.f32 %v792, %v334
      %v873 = vadd.f32 %v793, %v339
      %v874 = vadd.f32 %v794, %v344
      %v875 = vadd.f32 %v795, %v349
      %v876 = vadd.f32 %v796, %v354
      %v877 = vadd.f32 %v797, %v359
      %v878 = vadd.f32 %v798, %v364
      %v879 = vadd.f32 %v799, %v369
      %v880 = vadd.f32 %v800, %v374
      %v881 = vadd.f32 %v801, %v379
      %v882 = vadd.f32 %v802, %v384
      %v883 = vadd.f32 %v803, %v389
      %v884 = vadd.f32 %v804, %v394
      %v885 = vadd.f32 %v805, %v399
      %v886 = vadd.f32 %v806, %v404
      %v887 = vadd.f32 %v807, %v409
      %v888 = vadd.f32 %v808, %v414
      %v889 = vadd.f32 %v809, %v419
      %v890 = vadd.f32 %v810, %v424
      %v891 = vadd.f32 %v811, %v429
      %v892 = vadd.f32 %v812, %v434
      %v893 = vadd.f32 %v813, %v439
      %v894 = vadd.f32 %v814, %v444
      %v895 = vadd.f32 %v815, %v449
      %v896 = vadd.f32 %v816, %v454
      %v897 = vadd.f32 %v817, %v459
      %v898 = vadd.f32 %v818, %v464
      %v899 = vadd.f32 %v819, %v469
      %v900 = vadd.f32 %v820, %v474
      %v901 = vadd.f32 %v821, %v479
      %v902 = vadd.f32 %v822, %v484
      %v903 = vadd.f32 %v823, %v489
      %v904 = vadd.f32 %v824, %v494
      %v905 = vadd.f32 %v825, %v499
      %v906 = vadd.f32 %v826, %v504
      %v907 = vadd.f32 %v827, %v509
      %v908 = vadd.f32 %v828, %v514
      %v909 = vadd.f32 %v829, %v519
      %v910 = vadd.f32 %v830, %v524
      %v911 = vadd.f32 %v831, %v529
      %v912 = vadd.f32 %v832, %v534
      %v913 = vadd.f32 %v833, %v539
      %v914 = vadd.f32 %v834, %v544
      %v915 = vadd.f32 %v835, %v549
      %v916 = vadd.f32 %v836, %v554
      %v917 = vadd.f32 %v837, %v559
      %v918 = vadd.f32 %v838, %v564
      %v919 = vadd.f32 %v839, %v569
      %v920 = vadd.f32 %v840, %v574
      %v921 = vadd.f32 %v841, %v579
      %v922 = vadd.f32 %v842, %v584
      %v923 = vadd.f32 %v843, %v589
      %v924 = vadd.f32 %v844, %v594
      %v925 = vadd.f32 %v845, %v599
      %v926 = vadd.f32 %v846, %v604
      %v927 = vadd.f32 %v847, %v609
      %v928 = vadd.f32 %v848, %v614
      %v929 = vadd.f32 %v849, %v619
      %v930 = vadd.f32 %v850, %v624
      %v931 = vadd.f32 %v851, %v629
      %v932 = vadd.f32 %v852, %v634
      %v933 = vadd.f32 %v853, %v639
      %v934 = vadd.f32 %v854, %v644
      %v935 = vadd.f32 %v855, %v649
      %v936 = vadd.f32 %v856, %v654
      %v937 = vadd.f32 %v857, %v659
      %v938 = vadd.f32 %v858, %v664
      %v939 = vadd.f32 %v859, %v669
      %v940 = vadd.f32 %v860, %v674
      %v941 = vadd.f32 %v861, %v679
      %v942 = vadd.f32 %v862, %v684
      %v943 = vadd.f32 %v863, %v689
      %v944 = vadd.f32 %v864, %v694
      %945 = vst [vmem:[#allocation8] sm:$0xff] %v865
      %946 = vst [vmem:[#allocation8 + $0x8] sm:$0xff] %v866
      %947 = vst [vmem:[#allocation8 + $0x10] sm:$0xff] %v867
      %948 = vst [vmem:[#allocation8 + $0x18] sm:$0xff] %v868
      %949 = vst [vmem:[#allocation8 + $0x20] sm:$0xff] %v869
      %950 = vst [vmem:[#allocation8 + $0x28] sm:$0xff] %v870
      %951 = vst [vmem:[#allocation8 + $0x30] sm:$0xff] %v871
      %952 = vst [vmem:[#allocation8 + $0x38] sm:$0xff] %v872
      %953 = vst [vmem:[#allocation8 + $0x40] sm:$0xff] %v873
      %954 = vst [vmem:[#allocation8 + $0x48] sm:$0xff] %v874
      %955 = vst [vmem:[#allocation8 + $0x50] sm:$0xff] %v875
      %956 = vst [vmem:[#allocation8 + $0x58] sm:$0xff] %v876
      %957 = vst [vmem:[#allocation8 + $0x60] sm:$0xff] %v877
      %958 = vst [vmem:[#allocation8 + $0x68] sm:$0xff] %v878
      %959 = vst [vmem:[#allocation8 + $0x70] sm:$0xff] %v879
      %960 = vst [vmem:[#allocation8 + $0x78] sm:$0xff] %v880
      %961 = vst [vmem:[#allocation8 + $0x80] sm:$0xff] %v881
      %962 = vst [vmem:[#allocation8 + $0x88] sm:$0xff] %v882
      %963 = vst [vmem:[#allocation8 + $0x90] sm:$0xff] %v883
      %964 = vst [vmem:[#allocation8 + $0x98] sm:$0xff] %v884
      %965 = vst [vmem:[#allocation8 + $0xa0] sm:$0xff] %v885
      %966 = vst [vmem:[#allocation8 + $0xa8] sm:$0xff] %v886
      %967 = vst [vmem:[#allocation8 + $0xb0] sm:$0xff] %v887
      %968 = vst [vmem:[#allocation8 + $0xb8] sm:$0xff] %v888
      %969 = vst [vmem:[#allocation8 + $0xc0] sm:$0xff] %v889
      %970 = vst [vmem:[#allocation8 + $0xc8] sm:$0xff] %v890
      %971 = vst [vmem:[#allocation8 + $0xd0] sm:$0xff] %v891
      %972 = vst [vmem:[#allocation8 + $0xd8] sm:$0xff] %v892
      %973 = vst [vmem:[#allocation8 + $0xe0] sm:$0xff] %v893
      %974 = vst [vmem:[#allocation8 + $0xe8] sm:$0xff] %v894
      %975 = vst [vmem:[#allocation8 + $0xf0] sm:$0xff] %v895
      %976 = vst [vmem:[#allocation8 + $0xf8] sm:$0xff] %v896
      %977 = vst [vmem:[#allocation8 + $0x100] sm:$0xff] %v897
      %978 = vst [vmem:[#allocation8 + $0x108] sm:$0xff] %v898
      %979 = vst [vmem:[#allocation8 + $0x110] sm:$0xff] %v899
      %980 = vst [vmem:[#allocation8 + $0x118] sm:$0xff] %v900
      %981 = vst [vmem:[#allocation8 + $0x120] sm:$0xff] %v901
      %982 = vst [vmem:[#allocation8 + $0x128] sm:$0xff] %v902
      %983 = vst [vmem:[#allocation8 + $0x130] sm:$0xff] %v903
      %984 = vst [vmem:[#allocation8 + $0x138] sm:$0xff] %v904
      %985 = vst [vmem:[#allocation8 + $0x140] sm:$0xff] %v905
      %986 = vst [vmem:[#allocation8 + $0x148] sm:$0xff] %v906
      %987 = vst [vmem:[#allocation8 + $0x150] sm:$0xff] %v907
      %988 = vst [vmem:[#allocation8 + $0x158] sm:$0xff] %v908
      %989 = vst [vmem:[#allocation8 + $0x160] sm:$0xff] %v909
      %990 = vst [vmem:[#allocation8 + $0x168] sm:$0xff] %v910
      %991 = vst [vmem:[#allocation8 + $0x170] sm:$0xff] %v911
      %992 = vst [vmem:[#allocation8 + $0x178] sm:$0xff] %v912
      %993 = vst [vmem:[#allocation8 + $0x180] sm:$0xff] %v913
      %994 = vst [vmem:[#allocation8 + $0x188] sm:$0xff] %v914
      %995 = vst [vmem:[#allocation8 + $0x190] sm:$0xff] %v915
      %996 = vst [vmem:[#allocation8 + $0x198] sm:$0xff] %v916
      %997 = vst [vmem:[#allocation8 + $0x1a0] sm:$0xff] %v917
      %998 = vst [vmem:[#allocation8 + $0x1a8] sm:$0xff] %v918
      %999 = vst [vmem:[#allocation8 + $0x1b0] sm:$0xff] %v919
      %1000 = vst [vmem:[#allocation8 + $0x1b8] sm:$0xff] %v920
      %1001 = vst [vmem:[#allocation8 + $0x1c0] sm:$0xff] %v921
      %1002 = vst [vmem:[#allocation8 + $0x1c8] sm:$0xff] %v922
      %1003 = vst [vmem:[#allocation8 + $0x1d0] sm:$0xff] %v923
      %1004 = vst [vmem:[#allocation8 + $0x1d8] sm:$0xff] %v924
      %1005 = vst [vmem:[#allocation8 + $0x1e0] sm:$0xff] %v925
      %1006 = vst [vmem:[#allocation8 + $0x1e8] sm:$0xff] %v926
      %1007 = vst [vmem:[#allocation8 + $0x1f0] sm:$0xff] %v927
      %1008 = vst [vmem:[#allocation8 + $0x1f8] sm:$0xff] %v928
      %1009 = vst [vmem:[#allocation8 + $0x200] sm:$0xff] %v929
      %1010 = vst [vmem:[#allocation8 + $0x208] sm:$0xff] %v930
      %1011 = vst [vmem:[#allocation8 + $0x210] sm:$0xff] %v931
      %1012 = vst [vmem:[#allocation8 + $0x218] sm:$0xff] %v932
      %1013 = vst [vmem:[#allocation8 + $0x220] sm:$0xff] %v933
      %1014 = vst [vmem:[#allocation8 + $0x228] sm:$0xff] %v934
      %1015 = vst [vmem:[#allocation8 + $0x230] sm:$0xff] %v935
      %1016 = vst [vmem:[#allocation8 + $0x238] sm:$0xff] %v936
      %1017 = vst [vmem:[#allocation8 + $0x240] sm:$0xff] %v937
      %1018 = vst [vmem:[#allocation8 + $0x248] sm:$0xff] %v938
      %1019 = vst [vmem:[#allocation8 + $0x250] sm:$0xff] %v939
      %1020 = vst [vmem:[#allocation8 + $0x258] sm:$0xff] %v940
      %1021 = vst [vmem:[#allocation8 + $0x260] sm:$0xff] %v941
      %1022 = vst [vmem:[#allocation8 + $0x268] sm:$0xff] %v942
      %1023 = vst [vmem:[#allocation8 + $0x270] sm:$0xff] %v943
      %1024 = vst [vmem:[#allocation8 + $0x278] sm:$0xff] %v944
    $region33: #{tpu_custom_call.1} parent=1 // pred_fallthru
      _
    // Predicated region
    $region34: #{tpu_custom_call.1} parent=1 // pred_check
      _
    $region35: #{tpu_custom_call.1} parent=1 // pred_check_branch
      %1026 = sbr.rel (0) target = $region37
    $region36: #{tpu_custom_call.1} parent=1 // pred_region
      %s1028 = ssub.s32 10240, 10240
      %1029 = vsyncadd [#allocation4], %s1028
      %s1030 = sshll.u32 [#allocation8], 4
      %s1031 = int_to_ptr.vmem [resolvable:$true] %s1030
      %1036 = dma.vmem_to_hbm [thread:$0]  %s1031, 10240, %s3, [#allocation4], 128, 128, 8
    $region37: #{tpu_custom_call.1} parent=1 // pred_fallthru
      _
    // Predicated region
    $region38: #{tpu_custom_call.1} parent=1 // pred_check
      _
    $region39: #{tpu_custom_call.1} parent=1 // pred_check_branch
      %1038 = sbr.rel (0) target = $region41
    $region40: #{tpu_custom_call.1} parent=1 // pred_region
      %1039 = dma.done [#allocation4], 10240
    $region41: #{tpu_custom_call.1} parent=1 // pred_fallthru
      _
    %1040 = vsyncpa [#allocation3], 1
    %1041 = vsyncpa [#allocation6], 1
    %1042 = vsyncpa [#allocation4], 1

</llo_original>
